<compile_context>
chip_gen: v5e
topology: v5e:2x2
jax: 0.10.0
libtpu: 0.0.40
codegen_flags: <defaults>
</compile_context>

<pallas_src>
import functools

import jax
import jax.numpy as jnp
from jax.experimental import pallas as pl
from jax.experimental.pallas import tpu as pltpu


# --------------------------------------------------------------------------- #
# Kernels
# --------------------------------------------------------------------------- #
def _resident_kernel(n_mlps, use_scratch,
                     x_ref, w1_ref, b1_ref, w2_ref, b2_ref, o_ref, *scratch):
    """Weights-resident path.  Grid = (row_tile i,).  All layers' weights are
    VMEM-resident; the residual stream lives in o_ref (f32) or a scratch."""
    resid = scratch[0] if use_scratch else o_ref
    resid[...] = x_ref[...].astype(jnp.float32)
    for l in range(n_mlps):                       # static unroll over layers
        x = resid[...]                            # f32 residual stream
        h = jnp.dot(x.astype(jnp.bfloat16), w1_ref[l],      # bf16 MXU, f32 acc
                    preferred_element_type=jnp.float32)
        h = jnp.maximum(h + b1_ref[l].astype(jnp.float32), 0.0)
        y = jnp.dot(h.astype(jnp.bfloat16), w2_ref[l],
                    preferred_element_type=jnp.float32)
        resid[...] = x + y + b2_ref[l].astype(jnp.float32)
    if use_scratch:
        o_ref[...] = resid[...].astype(o_ref.dtype)


def _streaming_kernel(use_scratch,
                      x_ref, w1_ref, b1_ref, w2_ref, b2_ref, o_ref, *scratch):
    """Streaming path.  Grid = (row_tile i, layer l); layer-(l+1) weights are
    prefetched under layer l's compute.  The residual lives in the revisited
    output block (f32) or a scratch for non-f32 I/O."""
    layer = pl.program_id(1)
    resid = scratch[0] if use_scratch else o_ref

    @pl.when(layer == 0)
    def _():
        resid[...] = x_ref[...].astype(jnp.float32)

    x = resid[...]
    h = jnp.dot(x.astype(jnp.bfloat16), w1_ref[...],
                preferred_element_type=jnp.float32)
    h = jnp.maximum(h + b1_ref[...].astype(jnp.float32), 0.0)
    y = jnp.dot(h.astype(jnp.bfloat16), w2_ref[...],
                preferred_element_type=jnp.float32)
    resid[...] = x + y + b2_ref[...].astype(jnp.float32)

    if use_scratch:
        @pl.when(layer == pl.num_programs(1) - 1)
        def _():
            o_ref[...] = resid[...].astype(o_ref.dtype)


# --------------------------------------------------------------------------- #
# Tiling / VMEM helpers
# --------------------------------------------------------------------------- #
def _vmem_budget():
    """Derive the planning budget / compiler limit from the actual chip
    (128 MiB on v5e/v6e, 64 MiB per TensorCore on v7x)."""
    try:
        cap = int(pltpu.get_tpu_info().vmem_capacity_bytes)
    except Exception:
        cap = None
    if not cap or cap <= 0:
        cap = 64 << 20                     # conservative fallback (v7x per-TC)
    budget = int(cap * 0.70)               # working-set planning budget
    limit = int(cap * 0.90)                # compiler scoped-VMEM limit
    return budget, limit


def _align_tile(tm):
    """MXU-friendly row tile: multiples of 256 (v6e/v7x MXU), else 128 (v5e
    MXU width), else sublane-aligned 8."""
    if tm >= 256:
        return (tm // 256) * 256
    if tm >= 128:
        return (tm // 128) * 128
    return max(8, (tm // 8) * 8)


def _even_out_tiles(n_pad8, tm):
    """If the row-tile count is odd (>1), shrink tm to get an even count so
    v7x's 2 TensorCores stay balanced (row axis is 'parallel')."""
    nt = pl.cdiv(n_pad8, tm)
    if nt <= 1 or nt % 2 == 0:
        return tm
    tm2 = _align_tile(max(8, pl.cdiv(n_pad8, nt + 1)))
    if tm2 >= 8 and pl.cdiv(n_pad8, tm2) % 2 == 0:
        return tm2
    return tm


# --------------------------------------------------------------------------- #
# Wrapper
# --------------------------------------------------------------------------- #
def mlp_only_transformer_pallas(x, w1s, b1s, w2s, b2s, *, tm=None,
                                force_streaming=False):
    """x: (..., d_resid).  Returns same shape/dtype as x."""
    orig_shape = x.shape
    d_resid = orig_shape[-1]
    x2d = x.reshape(-1, d_resid)
    n_rows = x2d.shape[0]
    n_mlps, _, d_mlp = w1s.shape
    use_scratch = x.dtype != jnp.float32   # f32 residual carried in o_ref if f32

    budget, vmem_limit = _vmem_budget()

    # Per-row f32/bf16 activation footprint: x-in + out (double-buffered)
    # + (optional) resid scratch + h f32 + h bf16 + slack.
    per_row = (2 * 2 + 1) * d_resid * 4 + 8 * d_mlp
    weight_bytes_layer = 2 * (d_resid * d_mlp + d_mlp * d_resid)   # bf16 W1+W2
    bias_bytes_layer = 4 * (d_mlp + d_resid)

    n_pad8 = ((n_rows + 7) // 8) * 8

    # ---- path selection ---------------------------------------------------
    # Resident path: all layers' weights in VMEM (count 2x buffers to be safe).
    resident_fixed = 2 * n_mlps * (weight_bytes_layer + bias_bytes_layer)
    min_tm = min(256, n_pad8)
    weights_resident = (not force_streaming) and \
        (budget - resident_fixed >= per_row * min_tm)

    if weights_resident:
        fixed = resident_fixed
    else:
        fixed = 2 * (weight_bytes_layer + bias_bytes_layer)  # one layer, 2 bufs
        if fixed + per_row * 8 > budget:
            # TODO(synk): add a d_mlp-chunked accumulator path (inner
            # "arbitrary" axis over W1-column / W2-row chunks) so per-layer
            # weights larger than VMEM can stream without collapsing tm.
            raise ValueError(
                "Per-layer weights (%d bytes double-buffered) exceed the VMEM "
                "budget (%d bytes); the d_mlp-chunked path is not implemented."
                % (fixed, budget))

    if tm is None:
        avail = budget - fixed
        tm = min(1024, max(8, avail // per_row))   # 1024 keeps v6e/v7x MXU-bound
        tm = min(tm, n_pad8)
        tm = _align_tile(tm)
        tm = _even_out_tiles(n_pad8, tm)

    num_row_tiles = pl.cdiv(n_pad8, tm)
    n_pad = num_row_tiles * tm
    if n_pad != n_rows:
        x2d = jnp.pad(x2d, ((0, n_pad - n_rows), (0, 0)))

    # Advisory cost estimate for XLA scheduling around the call.
    flops = 4 * n_pad * d_resid * d_mlp * n_mlps
    weight_reads = (1 if weights_resident else num_row_tiles) * n_mlps * (
        weight_bytes_layer + bias_bytes_layer)
    bytes_accessed = 2 * n_pad * d_resid * 4 + weight_reads

    scratch_shapes = ([pltpu.VMEM((tm, d_resid), jnp.float32)]
                      if use_scratch else [])

    if weights_resident:
        kernel = functools.partial(_resident_kernel, n_mlps, use_scratch)
        grid_spec = pltpu.PrefetchScalarGridSpec(
            num_scalar_prefetch=0,
            grid=(num_row_tiles,),
            in_specs=[
                pl.BlockSpec((tm, d_resid), lambda i: (i, 0)),
                # Constant block index -> weights DMA'd from HBM once, then
                # stay VMEM-resident across all row tiles.
                pl.BlockSpec((n_mlps, d_resid, d_mlp), lambda i: (0, 0, 0)),
                pl.BlockSpec((n_mlps, 1, d_mlp), lambda i: (0, 0, 0)),
                pl.BlockSpec((n_mlps, d_mlp, d_resid), lambda i: (0, 0, 0)),
                pl.BlockSpec((n_mlps, 1, d_resid), lambda i: (0, 0, 0)),
            ],
            out_specs=pl.BlockSpec((tm, d_resid), lambda i: (i, 0)),
            scratch_shapes=scratch_shapes,
        )
        dim_sem = ("parallel",)
    else:
        kernel = functools.partial(_streaming_kernel, use_scratch)
        grid_spec = pltpu.PrefetchScalarGridSpec(
            num_scalar_prefetch=0,
            grid=(num_row_tiles, n_mlps),
            in_specs=[
                pl.BlockSpec((tm, d_resid), lambda i, l: (i, 0)),
                pl.BlockSpec((None, d_resid, d_mlp), lambda i, l: (l, 0, 0)),
                pl.BlockSpec((None, 1, d_mlp), lambda i, l: (l, 0, 0)),
                pl.BlockSpec((None, d_mlp, d_resid), lambda i, l: (l, 0, 0)),
                pl.BlockSpec((None, 1, d_resid), lambda i, l: (l, 0, 0)),
            ],
            out_specs=pl.BlockSpec((tm, d_resid), lambda i, l: (i, 0)),
            scratch_shapes=scratch_shapes,
        )
        dim_sem = ("parallel", "arbitrary")

    out = pl.pallas_call(
        kernel,
        out_shape=jax.ShapeDtypeStruct((n_pad, d_resid), x.dtype),
        grid_spec=grid_spec,
        compiler_params=pltpu.CompilerParams(
            dimension_semantics=dim_sem,
            vmem_limit_bytes=vmem_limit,
        ),
        cost_estimate=pl.CostEstimate(
            flops=int(flops), transcendentals=0,
            bytes_accessed=int(bytes_accessed)),
    )(x2d, w1s, b1s, w2s, b2s)

    if n_pad != n_rows:
        out = out[:n_rows]
    return out.reshape(orig_shape)


# --------------------------------------------------------------------------- #
# Parameter init (matches torch xavier_uniform_ + zero bias) and reference
# --------------------------------------------------------------------------- #
def xavier_uniform(key, fan_in, fan_out, dtype=jnp.float32):
    # torch.nn.init.xavier_uniform_: bound = sqrt(6 / (fan_in + fan_out)).
    bound = (6.0 / (fan_in + fan_out)) ** 0.5
    # Torch stores Linear weight as (out, in); sample that shape then transpose
    # to (in, out) for the kernel.
    w = jax.random.uniform(key, (fan_out, fan_in), dtype=dtype,
                           minval=-bound, maxval=bound)
    return w.T


def init_mlp_only_transformer(key, d_resid, d_mlp_ratio=4.0, n_mlps=1):
    d_mlp = int(d_resid * d_mlp_ratio)
    w1s, b1s, w2s, b2s = [], [], [], []
    for i in range(n_mlps):
        k1, k2 = jax.random.split(jax.random.fold_in(key, i))
        # Weights stored in bf16 (halves HBM/VMEM traffic, 2x MXU throughput).
        w1s.append(xavier_uniform(k1, d_resid, d_mlp).astype(jnp.bfloat16))
        w2s.append(xavier_uniform(k2, d_mlp, d_resid).astype(jnp.bfloat16))
        b1s.append(jnp.zeros((1, d_mlp), jnp.float32))
        b2s.append(jnp.zeros((1, d_resid), jnp.float32))
    return (jnp.stack(w1s), jnp.stack(b1s), jnp.stack(w2s), jnp.stack(b2s))


@jax.jit
def mlp_only_transformer_ref(x, w1s, b1s, w2s, b2s):
    """Pure-JAX reference mirroring the kernel's numerics (bf16 dot inputs,
    f32 accumulation), matching the PyTorch forward structure."""
    out = x
    for i in range(w1s.shape[0]):
        w1 = w1s[i].astype(jnp.float32)
        w2 = w2s[i].astype(jnp.float32)
        xb = out.astype(jnp.bfloat16).astype(jnp.float32)
        h = jnp.maximum(xb @ w1 + b1s[i], 0.0)
        hb = h.astype(jnp.bfloat16).astype(jnp.float32)
        out = out + (hb @ w2 + b2s[i])
    return out


if __name__ == "__main__":
    key = jax.random.PRNGKey(0)

    batch, seq = 2, 8
    d_resid = 32            # NOTE: real workloads should use d_resid % 128 == 0
    d_mlp_ratio = 4.0
    n_mlps = 2

    kx, kp = jax.random.split(key)
    x = jax.random.normal(kx, (batch, seq, d_resid), dtype=jnp.float32)
    w1s, b1s, w2s, b2s = init_mlp_only_transformer(kp, d_resid, d_mlp_ratio,
                                                   n_mlps)

    # Default path (weights-resident: small weights fit VMEM).
    out = mlp_only_transformer_pallas(x, w1s, b1s, w2s, b2s)
    jax.block_until_ready(out)

    # Also exercise the streaming (per-layer weight prefetch) path.
    out_stream = mlp_only_transformer_pallas(x, w1s, b1s, w2s, b2s,
                                             force_streaming=True)
    jax.block_until_ready(out_stream)

    ref = mlp_only_transformer_ref(x.reshape(-1, d_resid), w1s, b1s, w2s, b2s)
    ref = ref.reshape(batch, seq, d_resid)
    assert jnp.allclose(out, ref, atol=2e-3, rtol=2e-3), "resident mismatch"
    assert jnp.allclose(out_stream, ref, atol=2e-3, rtol=2e-3), "stream mismatch"

    print("KERNEL_OK")
</pallas_src>

<mosaic_0001>
module attributes {stable_mosaic.version = 11 : i64} {
  func.func @_resident_kernel(%arg0: i32, %arg1: memref<16x32xf32, #tpu.memory_space<vmem>>, %arg2: memref<2x32x128xbf16, #tpu.memory_space<vmem>>, %arg3: memref<2x1x128xf32, #tpu.memory_space<vmem>>, %arg4: memref<2x128x32xbf16, #tpu.memory_space<vmem>>, %arg5: memref<2x1x32xf32, #tpu.memory_space<vmem>>, %arg6: memref<16x32xf32, #tpu.memory_space<vmem>>) attributes {dimension_semantics = [#tpu.dimension_semantics<parallel>], iteration_bounds = array<i64: 1>, scalar_prefetch = 0 : i64, scratch_operands = 0 : i64, tpu.core_type = #tpu.core_type<tc>, window_params = [{transform_indices = @transform_0, window_bounds = array<i64: 16, 32>}, {pipeline_mode = #tpu.pipeline_mode<synchronous>, transform_indices = @transform_1, window_bounds = array<i64: 2, 32, 128>}, {pipeline_mode = #tpu.pipeline_mode<synchronous>, transform_indices = @transform_2, window_bounds = array<i64: 2, 1, 128>}, {pipeline_mode = #tpu.pipeline_mode<synchronous>, transform_indices = @transform_3, window_bounds = array<i64: 2, 128, 32>}, {pipeline_mode = #tpu.pipeline_mode<synchronous>, transform_indices = @transform_4, window_bounds = array<i64: 2, 1, 32>}, {transform_indices = @transform_5, window_bounds = array<i64: 16, 32>}]} {
    %c0 = arith.constant 0 : index
    %c0_0 = arith.constant 0 : index
    %0 = vector.load %arg1[%c0, %c0_0] : memref<16x32xf32, #tpu.memory_space<vmem>>, vector<16x32xf32>
    %c0_1 = arith.constant 0 : index
    %c0_2 = arith.constant 0 : index
    %1 = vector.load %arg6[%c0_1, %c0_2] : memref<16x32xf32, #tpu.memory_space<vmem>>, vector<16x32xf32>
    tpu.vector_store %arg6[%c0_1, %c0_2], %0 {strides = array<i32>} : memref<16x32xf32, #tpu.memory_space<vmem>>, vector<16x32xf32>,
    %c0_3 = arith.constant 0 : index
    %c0_4 = arith.constant 0 : index
    %2 = vector.load %arg6[%c0_3, %c0_4] : memref<16x32xf32, #tpu.memory_space<vmem>>, vector<16x32xf32>
    %3 = arith.truncf %2 : vector<16x32xf32> to vector<16x32xbf16>
    %c0_5 = arith.constant 0 : index
    %c0_6 = arith.constant 0 : index
    %c0_7 = arith.constant 0 : index
    %4 = vector.load %arg2[%c0_5, %c0_6, %c0_7] : memref<2x32x128xbf16, #tpu.memory_space<vmem>>, vector<1x32x128xbf16>
    %5 = vector.shape_cast %4 : vector<1x32x128xbf16> to vector<32x128xbf16>
    %cst = arith.constant dense<0.000000e+00> : vector<16x128xf32>
    %6 = tpu.matmul %3, %5, %cst {dimension_numbers = #tpu.dot_dimension_numbers<[1], [0], [0], [1], [0, 0, 1, 1], [], []>} : vector<16x32xbf16>, vector<32x128xbf16>, vector<16x128xf32> -> vector<16x128xf32>
    %c0_8 = arith.constant 0 : index
    %c0_9 = arith.constant 0 : index
    %c0_10 = arith.constant 0 : index
    %7 = vector.load %arg3[%c0_8, %c0_9, %c0_10] : memref<2x1x128xf32, #tpu.memory_space<vmem>>, vector<1x1x128xf32>
    %8 = vector.shape_cast %7 : vector<1x1x128xf32> to vector<1x128xf32>
    %9 = vector.broadcast %8 : vector<1x128xf32> to vector<16x128xf32>
    %10 = arith.addf %6, %9 : vector<16x128xf32>
    %cst_11 = arith.constant 0.000000e+00 : f32
    %11 = vector.broadcast %cst_11 : f32 to vector<16x128xf32>
    %12 = arith.maximumf %10, %11 : vector<16x128xf32>
    %13 = arith.truncf %12 : vector<16x128xf32> to vector<16x128xbf16>
    %c0_12 = arith.constant 0 : index
    %c0_13 = arith.constant 0 : index
    %c0_14 = arith.constant 0 : index
    %14 = vector.load %arg4[%c0_12, %c0_13, %c0_14] : memref<2x128x32xbf16, #tpu.memory_space<vmem>>, vector<1x128x32xbf16>
    %15 = vector.shape_cast %14 : vector<1x128x32xbf16> to vector<128x32xbf16>
    %cst_15 = arith.constant dense<0.000000e+00> : vector<16x32xf32>
    %16 = tpu.matmul %13, %15, %cst_15 {dimension_numbers = #tpu.dot_dimension_numbers<[1], [0], [0], [1], [0, 0, 1, 1], [], []>} : vector<16x128xbf16>, vector<128x32xbf16>, vector<16x32xf32> -> vector<16x32xf32>
    %17 = arith.addf %2, %16 : vector<16x32xf32>
    %c0_16 = arith.constant 0 : index
    %c0_17 = arith.constant 0 : index
    %c0_18 = arith.constant 0 : index
    %18 = vector.load %arg5[%c0_16, %c0_17, %c0_18] : memref<2x1x32xf32, #tpu.memory_space<vmem>>, vector<1x1x32xf32>
    %19 = vector.shape_cast %18 : vector<1x1x32xf32> to vector<1x32xf32>
    %20 = vector.broadcast %19 : vector<1x32xf32> to vector<16x32xf32>
    %21 = arith.addf %17, %20 : vector<16x32xf32>
    %c0_19 = arith.constant 0 : index
    %c0_20 = arith.constant 0 : index
    %22 = vector.load %arg6[%c0_19, %c0_20] : memref<16x32xf32, #tpu.memory_space<vmem>>, vector<16x32xf32>
    tpu.vector_store %arg6[%c0_19, %c0_20], %21 {strides = array<i32>} : memref<16x32xf32, #tpu.memory_space<vmem>>, vector<16x32xf32>,
    %c0_21 = arith.constant 0 : index
    %c0_22 = arith.constant 0 : index
    %23 = vector.load %arg6[%c0_21, %c0_22] : memref<16x32xf32, #tpu.memory_space<vmem>>, vector<16x32xf32>
    %24 = arith.truncf %23 : vector<16x32xf32> to vector<16x32xbf16>
    %c1 = arith.constant 1 : index
    %c0_23 = arith.constant 0 : index
    %c0_24 = arith.constant 0 : index
    %25 = vector.load %arg2[%c1, %c0_23, %c0_24] : memref<2x32x128xbf16, #tpu.memory_space<vmem>>, vector<1x32x128xbf16>
    %26 = vector.shape_cast %25 : vector<1x32x128xbf16> to vector<32x128xbf16>
    %cst_25 = arith.constant dense<0.000000e+00> : vector<16x128xf32>
    %27 = tpu.matmul %24, %26, %cst_25 {dimension_numbers = #tpu.dot_dimension_numbers<[1], [0], [0], [1], [0, 0, 1, 1], [], []>} : vector<16x32xbf16>, vector<32x128xbf16>, vector<16x128xf32> -> vector<16x128xf32>
    %c1_26 = arith.constant 1 : index
    %c0_27 = arith.constant 0 : index
    %c0_28 = arith.constant 0 : index
    %28 = vector.load %arg3[%c1_26, %c0_27, %c0_28] : memref<2x1x128xf32, #tpu.memory_space<vmem>>, vector<1x1x128xf32>
    %29 = vector.shape_cast %28 : vector<1x1x128xf32> to vector<1x128xf32>
    %30 = vector.broadcast %29 : vector<1x128xf32> to vector<16x128xf32>
    %31 = arith.addf %27, %30 : vector<16x128xf32>
    %cst_29 = arith.constant 0.000000e+00 : f32
    %32 = vector.broadcast %cst_29 : f32 to vector<16x128xf32>
    %33 = arith.maximumf %31, %32 : vector<16x128xf32>
    %34 = arith.truncf %33 : vector<16x128xf32> to vector<16x128xbf16>
    %c1_30 = arith.constant 1 : index
    %c0_31 = arith.constant 0 : index
    %c0_32 = arith.constant 0 : index
    %35 = vector.load %arg4[%c1_30, %c0_31, %c0_32] : memref<2x128x32xbf16, #tpu.memory_space<vmem>>, vector<1x128x32xbf16>
    %36 = vector.shape_cast %35 : vector<1x128x32xbf16> to vector<128x32xbf16>
    %cst_33 = arith.constant dense<0.000000e+00> : vector<16x32xf32>
    %37 = tpu.matmul %34, %36, %cst_33 {dimension_numbers = #tpu.dot_dimension_numbers<[1], [0], [0], [1], [0, 0, 1, 1], [], []>} : vector<16x128xbf16>, vector<128x32xbf16>, vector<16x32xf32> -> vector<16x32xf32>
    %38 = arith.addf %23, %37 : vector<16x32xf32>
    %c1_34 = arith.constant 1 : index
    %c0_35 = arith.constant 0 : index
    %c0_36 = arith.constant 0 : index
    %39 = vector.load %arg5[%c1_34, %c0_35, %c0_36] : memref<2x1x32xf32, #tpu.memory_space<vmem>>, vector<1x1x32xf32>
    %40 = vector.shape_cast %39 : vector<1x1x32xf32> to vector<1x32xf32>
    %41 = vector.broadcast %40 : vector<1x32xf32> to vector<16x32xf32>
    %42 = arith.addf %38, %41 : vector<16x32xf32>
    %c0_37 = arith.constant 0 : index
    %c0_38 = arith.constant 0 : index
    %43 = vector.load %arg6[%c0_37, %c0_38] : memref<16x32xf32, #tpu.memory_space<vmem>>, vector<16x32xf32>
    tpu.vector_store %arg6[%c0_37, %c0_38], %42 {strides = array<i32>} : memref<16x32xf32, #tpu.memory_space<vmem>>, vector<16x32xf32>,
    return
  }
  func.func @transform_0(%arg0: i32) -> (i32, i32) {
    %c0_i32 = arith.constant 0 : i32
    %c0_i32_0 = arith.constant 0 : i32
    return %arg0, %c0_i32 : i32, i32
  }
  func.func @transform_1(%arg0: i32) -> (i32, i32, i32) {
    %c0_i32 = arith.constant 0 : i32
    %c0_i32_0 = arith.constant 0 : i32
    %c0_i32_1 = arith.constant 0 : i32
    %c0_i32_2 = arith.constant 0 : i32
    return %c0_i32, %c0_i32_0, %c0_i32_1 : i32, i32, i32
  }
  func.func @transform_2(%arg0: i32) -> (i32, i32, i32) {
    %c0_i32 = arith.constant 0 : i32
    %c0_i32_0 = arith.constant 0 : i32
    %c0_i32_1 = arith.constant 0 : i32
    %c0_i32_2 = arith.constant 0 : i32
    return %c0_i32, %c0_i32_0, %c0_i32_1 : i32, i32, i32
  }
  func.func @transform_3(%arg0: i32) -> (i32, i32, i32) {
    %c0_i32 = arith.constant 0 : i32
    %c0_i32_0 = arith.constant 0 : i32
    %c0_i32_1 = arith.constant 0 : i32
    %c0_i32_2 = arith.constant 0 : i32
    return %c0_i32, %c0_i32_0, %c0_i32_1 : i32, i32, i32
  }
  func.func @transform_4(%arg0: i32) -> (i32, i32, i32) {
    %c0_i32 = arith.constant 0 : i32
    %c0_i32_0 = arith.constant 0 : i32
    %c0_i32_1 = arith.constant 0 : i32
    %c0_i32_2 = arith.constant 0 : i32
    return %c0_i32, %c0_i32_0, %c0_i32_1 : i32, i32, i32
  }
  func.func @transform_5(%arg0: i32) -> (i32, i32) {
    %c0_i32 = arith.constant 0 : i32
    %c0_i32_0 = arith.constant 0 : i32
    return %arg0, %c0_i32 : i32, i32
  }
}

</mosaic_0001>

<llo_original>
// kernel: tpu_custom_call.1
$region0: #{tpu_custom_call.1}
  #allocation0 [shape = 'u32[]', space=smem, size = 0x4, offset = 0x4, fixed_abs, tag = 'smem constant byte address 0x4 - core index']
  #allocation1 [shape = 'u32[72,128]{1,0:T(1,128)}', space=vmem, size = 0x9000, scoped, tag = 'internal scratch']
  %s0 = inlined_call_operand.vmem [shape: f32[16,32], index: 0, kind: input, shape index: {}]
  %s1 = inlined_call_operand.vmem [shape: bf16[2,32,128], index: 1, kind: input, shape index: {}]
  %s2 = inlined_call_operand.vmem [shape: f32[2,1,128], index: 2, kind: input, shape index: {}]
  %s3 = inlined_call_operand.vmem [shape: bf16[2,128,32], index: 3, kind: input, shape index: {}]
  %s4 = inlined_call_operand.vmem [shape: f32[2,1,32], index: 4, kind: input, shape index: {}]
  %s5 = inlined_call_operand.hbm [shape: f32[16,32], index: 5, kind: output, shape index: {}]
  %s6 = sld [smem:[#allocation0]]
  $region30: #{tpu_custom_call.1} parent=0
    _
  %s8 = ssub.s32 1, %s6
  %s9 = scalar_select 0, %s8, %s6
  $region1: #{tpu_custom_call.1} parent=0
    #allocation2 [shape = 'u8[8192]{0}', space=vmem, size = 0x2000, scoped, tag = 'output window, operand 0, single buffered']
    #allocation3 [shape = 's32[1]{0}', space=sflag, size = 0x4, scoped, tag = 'scoped memory for tpu_custom_call.1']
    %10 = vsyncpa [#allocation3], 0
    // Predicated region
    $region2: #{tpu_custom_call.1} parent=1 // pred_check
      _
    $region3: #{tpu_custom_call.1} parent=1 // pred_check_branch
      %12 = sbr.rel (0) target = $region5
    $region4: #{tpu_custom_call.1} parent=1 // pred_region
      _
    $region5: #{tpu_custom_call.1} parent=1 // pred_fallthru
      _
    // Predicated region
    $region6: #{tpu_custom_call.1} parent=1 // pred_check
      _
    $region7: #{tpu_custom_call.1} parent=1 // pred_check_branch
      %14 = sbr.rel (0) target = $region9
    $region8: #{tpu_custom_call.1} parent=1 // pred_region
      _
    $region9: #{tpu_custom_call.1} parent=1 // pred_fallthru
      _
    // Predicated region
    $region10: #{tpu_custom_call.1} parent=1 // pred_check
      _
    $region11: #{tpu_custom_call.1} parent=1 // pred_check_branch
      %16 = sbr.rel (0) target = $region13
    $region12: #{tpu_custom_call.1} parent=1 // pred_region
      _
    $region13: #{tpu_custom_call.1} parent=1 // pred_fallthru
      _
    // Predicated region
    $region14: #{tpu_custom_call.1} parent=1 // pred_check
      _
    $region15: #{tpu_custom_call.1} parent=1 // pred_check_branch
      %18 = sbr.rel (0) target = $region17
    $region16: #{tpu_custom_call.1} parent=1 // pred_region
      _
    $region17: #{tpu_custom_call.1} parent=1 // pred_fallthru
      _
    // Predicated region
    $region18: #{tpu_custom_call.1} parent=1 // pred_check
      _
    $region19: #{tpu_custom_call.1} parent=1 // pred_check_branch
      %20 = sbr.rel (0) target = $region21
    $region20: #{tpu_custom_call.1} parent=1 // pred_region
      _
    $region21: #{tpu_custom_call.1} parent=1 // pred_fallthru
      _
    %v22 = vld [vmem:[%s0] sm:$0xff]
    %v23 = vld [vmem:[%s0 + $0x8] sm:$0xff]
    %vm24 = vcmask 261120
    %25 = vst.msk [vmem:[#allocation2] sm:$0xff] %vm24, %v22
    %26 = vst.msk [vmem:[#allocation2 + $0x8] sm:$0xff] %vm24, %v23
    %v27 = vld [vmem:[#allocation2] sm:$0xff]
    %v28 = vld [vmem:[#allocation2 + $0x8] sm:$0xff]
    %v29 = vpack.c.bf16 %v28, %v27
    %v30 = vld [vmem:[%s1] sm:$0xf]
    %v31 = vld [vmem:[%s1 + $0x4] sm:$0xf]
    %v32 = vld [vmem:[%s1 + $0x8] sm:$0xf]
    %v33 = vld [vmem:[%s1 + $0xc] sm:$0xf]
    %v34 = vld [vmem:[%s2] sm:$0x1]
    %v36 = vperm.slane %v34, 0
    %v42 = vunpack.c.l.b16 %v30
    %v43 = vunpack.c.l.b16 %v31
    %v44 = vunpack.c.l.b16 %v32
    %v45 = vunpack.c.l.b16 %v33
    %v46 = vpack.c.b16 %v43, %v42
    %v47 = vpack.c.b16 %v45, %v44
    %v51 = vsel %vm24, %v29, 0
    %53 = vmatpush.bf16.msra.mxu0 0
    %54 = vmatpush.bf16.msra.mxu0 0
    %55 = vmatpush.bf16.msra.mxu0 0
    %56 = vmatpush.bf16.msra.mxu0 0
    %57 = vmatpush.bf16.msra.mxu0 0
    %58 = vmatpush.bf16.msra.mxu0 0
    %59 = vmatpush.bf16.msra.mxu0 %v47
    %60 = vmatpush.bf16.msra.mxu0 %v46
    %61 = vmatmul.bf16.gmra.mxu0 %v51
    %v62 = vpop.f32.mrf.mxu0
    %v63 = vadd.f32 %v36, %v62
    %v64 = vpop.f32.mrf.mxu0
    %v65 = vadd.f32 %v36, %v64
    %66 = vdwg.mxu0
    %v67 = vmax.f32 %v63, 0.0
    %v68 = vmax.f32 %v65, 0.0
    %v69 = vpack.c.bf16 %v68, %v67
    %v70 = vld [vmem:[%s3] sm:$0xf]
    %v71 = vld [vmem:[%s3 + $0x4] sm:$0xf]
    %v72 = vld [vmem:[%s3 + $0x8] sm:$0xf]
    %v73 = vld [vmem:[%s3 + $0xc] sm:$0xf]
    %v74 = vld [vmem:[%s3 + $0x10] sm:$0xf]
    %v75 = vld [vmem:[%s3 + $0x14] sm:$0xf]
    %v76 = vld [vmem:[%s3 + $0x18] sm:$0xf]
    %v77 = vld [vmem:[%s3 + $0x1c] sm:$0xf]
    %v78 = vld [vmem:[%s3 + $0x20] sm:$0xf]
    %v79 = vld [vmem:[%s3 + $0x24] sm:$0xf]
    %v80 = vld [vmem:[%s3 + $0x28] sm:$0xf]
    %v81 = vld [vmem:[%s3 + $0x2c] sm:$0xf]
    %v82 = vld [vmem:[%s3 + $0x30] sm:$0xf]
    %v83 = vld [vmem:[%s3 + $0x34] sm:$0xf]
    %v84 = vld [vmem:[%s3 + $0x38] sm:$0xf]
    %v85 = vld [vmem:[%s3 + $0x3c] sm:$0xf]
    %v102 = vunpack.c.l.b16 %v70
    %v103 = vunpack.c.l.b16 %v71
    %v104 = vunpack.c.l.b16 %v72
    %v105 = vunpack.c.l.b16 %v73
    %v106 = vunpack.c.l.b16 %v74
    %v107 = vunpack.c.l.b16 %v75
    %v108 = vunpack.c.l.b16 %v76
    %v109 = vunpack.c.l.b16 %v77
    %v110 = vunpack.c.l.b16 %v78
    %v111 = vunpack.c.l.b16 %v79
    %v112 = vunpack.c.l.b16 %v80
    %v113 = vunpack.c.l.b16 %v81
    %v114 = vunpack.c.l.b16 %v82
    %v115 = vunpack.c.l.b16 %v83
    %v116 = vunpack.c.l.b16 %v84
    %v117 = vunpack.c.l.b16 %v85
    %v118 = vpack.c.b16 %v103, %v102
    %v119 = vpack.c.b16 %v105, %v104
    %v120 = vpack.c.b16 %v107, %v106
    %v121 = vpack.c.b16 %v109, %v108
    %v122 = vpack.c.b16 %v111, %v110
    %v123 = vpack.c.b16 %v113, %v112
    %v124 = vpack.c.b16 %v115, %v114
    %v125 = vpack.c.b16 %v117, %v116
    %134 = vmatpush.bf16.msra.mxu0 %v125
    %135 = vmatpush.bf16.msra.mxu0 %v124
    %136 = vmatpush.bf16.msra.mxu0 %v123
    %137 = vmatpush.bf16.msra.mxu0 %v122
    %138 = vmatpush.bf16.msra.mxu0 %v121
    %139 = vmatpush.bf16.msra.mxu0 %v120
    %140 = vmatpush.bf16.msra.mxu0 %v119
    %141 = vmatpush.bf16.msra.mxu0 %v118
    %142 = vmatmul.bf16.gmra.mxu0 %v69
    %v143 = vpop.f32.mrf.mxu0
    %v144 = vadd.f32 0.0, %v143
    %v145 = vpop.f32.mrf.mxu0
    %v146 = vadd.f32 0.0, %v145
    %147 = vdwg.mxu0
    %v148 = vadd.f32 %v27, %v144
    %v149 = vadd.f32 %v28, %v146
    %v150 = vld [vmem:[%s4] sm:$0x1]
    %v152 = vperm.slane %v150, 0
    %v154 = vadd.f32 %v148, %v152
    %v155 = vadd.f32 %v149, %v152
    %156 = vst.msk [vmem:[#allocation2] sm:$0xff] %vm24, %v154
    %157 = vst.msk [vmem:[#allocation2 + $0x8] sm:$0xff] %vm24, %v155
    %v158 = vld [vmem:[#allocation2] sm:$0xff]
    %v159 = vld [vmem:[#allocation2 + $0x8] sm:$0xff]
    %v160 = vpack.c.bf16 %v159, %v158
    %s161 = scalar_lea.vmem %s1, 16
    %v162 = vld [vmem:[%s161] sm:$0xf]
    %v163 = vld [vmem:[%s161 + $0x4] sm:$0xf]
    %v164 = vld [vmem:[%s161 + $0x8] sm:$0xf]
    %v165 = vld [vmem:[%s161 + $0xc] sm:$0xf]
    %s166 = scalar_lea.vmem %s2, 1
    %v167 = vld [vmem:[%s166] sm:$0x1]
    %v169 = vperm.slane %v167, 0
    %v175 = vunpack.c.l.b16 %v162
    %v176 = vunpack.c.l.b16 %v163
    %v177 = vunpack.c.l.b16 %v164
    %v178 = vunpack.c.l.b16 %v165
    %v179 = vpack.c.b16 %v176, %v175
    %v180 = vpack.c.b16 %v178, %v177
    %v184 = vsel %vm24, %v160, 0
    %186 = vmatpush.bf16.msra.mxu0 0
    %187 = vmatpush.bf16.msra.mxu0 0
    %188 = vmatpush.bf16.msra.mxu0 0
    %189 = vmatpush.bf16.msra.mxu0 0
    %190 = vmatpush.bf16.msra.mxu0 0
    %191 = vmatpush.bf16.msra.mxu0 0
    %192 = vmatpush.bf16.msra.mxu0 %v180
    %193 = vmatpush.bf16.msra.mxu0 %v179
    %194 = vmatmul.bf16.gmra.mxu0 %v184
    %v195 = vpop.f32.mrf.mxu0
    %v196 = vadd.f32 %v169, %v195
    %v197 = vpop.f32.mrf.mxu0
    %v198 = vadd.f32 %v169, %v197
    %199 = vdwg.mxu0
    %v200 = vmax.f32 %v196, 0.0
    %v201 = vmax.f32 %v198, 0.0
    %v202 = vpack.c.bf16 %v201, %v200
    %s203 = scalar_lea.vmem %s3, 64
    %v204 = vld [vmem:[%s203] sm:$0xf]
    %v205 = vld [vmem:[%s203 + $0x4] sm:$0xf]
    %v206 = vld [vmem:[%s203 + $0x8] sm:$0xf]
    %v207 = vld [vmem:[%s203 + $0xc] sm:$0xf]
    %v208 = vld [vmem:[%s203 + $0x10] sm:$0xf]
    %v209 = vld [vmem:[%s203 + $0x14] sm:$0xf]
    %v210 = vld [vmem:[%s203 + $0x18] sm:$0xf]
    %v211 = vld [vmem:[%s203 + $0x1c] sm:$0xf]
    %v212 = vld [vmem:[%s203 + $0x20] sm:$0xf]
    %v213 = vld [vmem:[%s203 + $0x24] sm:$0xf]
    %v214 = vld [vmem:[%s203 + $0x28] sm:$0xf]
    %v215 = vld [vmem:[%s203 + $0x2c] sm:$0xf]
    %v216 = vld [vmem:[%s203 + $0x30] sm:$0xf]
    %v217 = vld [vmem:[%s203 + $0x34] sm:$0xf]
    %v218 = vld [vmem:[%s203 + $0x38] sm:$0xf]
    %v219 = vld [vmem:[%s203 + $0x3c] sm:$0xf]
    %v236 = vunpack.c.l.b16 %v204
    %v237 = vunpack.c.l.b16 %v205
    %v238 = vunpack.c.l.b16 %v206
    %v239 = vunpack.c.l.b16 %v207
    %v240 = vunpack.c.l.b16 %v208
    %v241 = vunpack.c.l.b16 %v209
    %v242 = vunpack.c.l.b16 %v210
    %v243 = vunpack.c.l.b16 %v211
    %v244 = vunpack.c.l.b16 %v212
    %v245 = vunpack.c.l.b16 %v213
    %v246 = vunpack.c.l.b16 %v214
    %v247 = vunpack.c.l.b16 %v215
    %v248 = vunpack.c.l.b16 %v216
    %v249 = vunpack.c.l.b16 %v217
    %v250 = vunpack.c.l.b16 %v218
    %v251 = vunpack.c.l.b16 %v219
    %v252 = vpack.c.b16 %v237, %v236
    %v253 = vpack.c.b16 %v239, %v238
    %v254 = vpack.c.b16 %v241, %v240
    %v255 = vpack.c.b16 %v243, %v242
    %v256 = vpack.c.b16 %v245, %v244
    %v257 = vpack.c.b16 %v247, %v246
    %v258 = vpack.c.b16 %v249, %v248
    %v259 = vpack.c.b16 %v251, %v250
    %268 = vmatpush.bf16.msra.mxu0 %v259
    %269 = vmatpush.bf16.msra.mxu0 %v258
    %270 = vmatpush.bf16.msra.mxu0 %v257
    %271 = vmatpush.bf16.msra.mxu0 %v256
    %272 = vmatpush.bf16.msra.mxu0 %v255
    %273 = vmatpush.bf16.msra.mxu0 %v254
    %274 = vmatpush.bf16.msra.mxu0 %v253
    %275 = vmatpush.bf16.msra.mxu0 %v252
    %276 = vmatmul.bf16.gmra.mxu0 %v202
    %v277 = vpop.f32.mrf.mxu0
    %v278 = vadd.f32 0.0, %v277
    %v279 = vpop.f32.mrf.mxu0
    %v280 = vadd.f32 0.0, %v279
    %281 = vdwg.mxu0
    %v282 = vadd.f32 %v158, %v278
    %v283 = vadd.f32 %v159, %v280
    %s284 = scalar_lea.vmem %s4, 1
    %v285 = vld [vmem:[%s284] sm:$0x1]
    %v287 = vperm.slane %v285, 0
    %v289 = vadd.f32 %v282, %v287
    %v290 = vadd.f32 %v283, %v287
    %291 = vst.msk [vmem:[#allocation2] sm:$0xff] %vm24, %v289
    %292 = vst.msk [vmem:[#allocation2 + $0x8] sm:$0xff] %vm24, %v290
    // Predicated region
    $region22: #{tpu_custom_call.1} parent=1 // pred_check
      _
    $region23: #{tpu_custom_call.1} parent=1 // pred_check_branch
      %294 = sbr.rel (0) target = $region25
    $region24: #{tpu_custom_call.1} parent=1 // pred_region
      %296 = vsyncadd [#allocation3], 0
      %s297 = sshll.u32 [#allocation2], 4
      %s298 = int_to_ptr.vmem [resolvable:$true] %s297
      %s299 = sshll.u32 %s5, 4
      %s300 = int_to_ptr.hbm [resolvable:$true] %s299
      %305 = dma.vmem_to_hbm [thread:$0]  %s298, 256, %s300, [#allocation3], 128, 128, 8
    $region25: #{tpu_custom_call.1} parent=1 // pred_fallthru
      _
    // Predicated region
    $region26: #{tpu_custom_call.1} parent=1 // pred_check
      _
    $region27: #{tpu_custom_call.1} parent=1 // pred_check_branch
      %307 = sbr.rel (0) target = $region29
    $region28: #{tpu_custom_call.1} parent=1 // pred_region
      %309 = dma.done [#allocation3], 256
    $region29: #{tpu_custom_call.1} parent=1 // pred_fallthru
      _
    %310 = vsyncpa [#allocation3], 1

</llo_original>
